<compile_context>
chip_gen: v7x
topology: tpu7x:2x2x1
jax: 0.10.0
libtpu: 0.0.40
codegen_flags: <defaults>
</compile_context>

<pallas_src>
import functools
import math

import jax
import jax.numpy as jnp
from jax import lax
from jax.experimental import pallas as pl
from jax.experimental.pallas import tpu as pltpu

_LN_EPS = 1e-12
_INV_SQRT2 = 0.7071067811865476
_VMEM_LIMIT = 64 * 1024 * 1024  # conservative: fits v7x (64 MiB) and v5e/v6e (128 MiB)


def _gelu(x):
    # exact (erf-based) GELU as used by BERT
    return 0.5 * x * (1.0 + lax.erf(x * _INV_SQRT2))


def _pick_tile(dim, pref):
    """Full dim if it is small, otherwise the largest divisor <= pref obtained by
    halving (keeps 128/256-aligned tiles for BERT-like dims)."""
    if dim <= pref:
        return dim
    t = pref
    while dim % t:
        t //= 2
    return max(t, 1)


# ----------------------------------------------------------------------------
# Kernels
# ----------------------------------------------------------------------------

def _dense_kernel(x_ref, w_ref, b_ref, o_ref, acc_ref, *, activation):
    """Tiled o = act(x @ w + b); grid = (M/tm, N/tn, K/tk), f32 accumulator."""
    @pl.when(pl.program_id(2) == 0)
    def _init():
        acc_ref[...] = jnp.zeros_like(acc_ref)

    acc_ref[...] += jnp.dot(x_ref[...], w_ref[...],
                            preferred_element_type=jnp.float32)

    @pl.when(pl.program_id(2) == pl.num_programs(2) - 1)
    def _finalize():
        acc = acc_ref[...] + b_ref[...]
        if activation == "gelu":
            acc = _gelu(acc)
        o_ref[...] = acc.astype(o_ref.dtype)


def _dense_res_ln_kernel(x_ref, w_ref, b_ref, res_ref, g_ref, bln_ref,
                         o_ref, acc_ref, *, eps):
    """Tiled o = LayerNorm(x @ w + b + residual); grid = (M/tm, K/tk).
    The residual-add + LayerNorm run in the epilogue of the matmul, so the pre-LN
    activation never round-trips through HBM."""
    @pl.when(pl.program_id(1) == 0)
    def _init():
        acc_ref[...] = jnp.zeros_like(acc_ref)

    acc_ref[...] += jnp.dot(x_ref[...], w_ref[...],
                            preferred_element_type=jnp.float32)

    @pl.when(pl.program_id(1) == pl.num_programs(1) - 1)
    def _finalize():
        y = acc_ref[...] + b_ref[...] + res_ref[...].astype(jnp.float32)
        mean = jnp.mean(y, axis=-1, keepdims=True)
        var = jnp.mean((y - mean) * (y - mean), axis=-1, keepdims=True)
        y = (y - mean) * lax.rsqrt(var + eps)
        o_ref[...] = (y * g_ref[...] + bln_ref[...]).astype(o_ref.dtype)


def _ffn_kernel(x_ref, wi_ref, bi_ref, wo_ref, bo_ref, g_ref, bln_ref,
                o_ref, acc_ref, *, eps):
    """Fused FFN: o = LayerNorm(gelu(x@wi+bi) @ wo + bo + x).
    grid = (M/tm, I/tki); per-step [tm, tki] intermediate chunk stays in VMEM
    and is immediately consumed by the down-projection.  x_ref doubles as the
    residual (same block for every k step, so it is DMA'd only once)."""
    k = pl.program_id(1)

    @pl.when(k == 0)
    def _init():
        acc_ref[...] = jnp.zeros_like(acc_ref)

    inter = jnp.dot(x_ref[...], wi_ref[...], preferred_element_type=jnp.float32)
    inter = _gelu(inter + bi_ref[...])
    acc_ref[...] += jnp.dot(inter.astype(wo_ref.dtype), wo_ref[...],
                            preferred_element_type=jnp.float32)

    @pl.when(k == pl.num_programs(1) - 1)
    def _finalize():
        y = acc_ref[...] + bo_ref[...] + x_ref[...].astype(jnp.float32)
        mean = jnp.mean(y, axis=-1, keepdims=True)
        var = jnp.mean((y - mean) * (y - mean), axis=-1, keepdims=True)
        y = (y - mean) * lax.rsqrt(var + eps)
        o_ref[...] = (y * g_ref[...] + bln_ref[...]).astype(o_ref.dtype)


def _attn_kernel(qkv_ref, mask_ref, o_ref, *, num_heads, head_dim, scale):
    """Per-batch attention on the fused [S, 3H] QKV slab.
    Heads stay concatenated on the lane axis (lane-dense loads/stores, no JAX
    transposes between pallas_calls)."""
    qkv = qkv_ref[0]                 # (S, 3H) bf16
    mask = mask_ref[0]               # (1, S)  f32 additive mask
    hidden = num_heads * head_dim
    ctx_parts = []
    for h in range(num_heads):       # static unroll; per-head lane slices
        lo = h * head_dim
        q = qkv[:, lo:lo + head_dim]
        k = qkv[:, hidden + lo:hidden + lo + head_dim]
        v = qkv[:, 2 * hidden + lo:2 * hidden + lo + head_dim]
        s = jnp.dot(q, k.T, preferred_element_type=jnp.float32) * scale + mask
        s = s - jnp.max(s, axis=-1, keepdims=True)
        p = jnp.exp(s)
        p = p * pl.reciprocal(jnp.sum(p, axis=-1, keepdims=True), approx=True)
        ctx_parts.append(jnp.dot(p.astype(v.dtype), v,
                                 preferred_element_type=jnp.float32))
    # single lane-dense store of the full [S, H] context tile
    o_ref[0] = jnp.concatenate(ctx_parts, axis=-1).astype(o_ref.dtype)


def _ln_kernel(x_ref, g_ref, b_ref, o_ref, *, eps):
    """Row-tiled LayerNorm (no residual) — embedding LN."""
    x = x_ref[...].astype(jnp.float32)
    mean = jnp.mean(x, axis=-1, keepdims=True)
    var = jnp.mean((x - mean) * (x - mean), axis=-1, keepdims=True)
    y = (x - mean) * lax.rsqrt(var + eps)
    o_ref[...] = (y * g_ref[...] + b_ref[...]).astype(o_ref.dtype)


# ----------------------------------------------------------------------------
# Wrappers
# ----------------------------------------------------------------------------

def dense(x, w, b, activation=None, *, tm=256, tn=256, tk=512):
    M, K = x.shape
    N = w.shape[1]
    tm, tn, tk = _pick_tile(M, tm), _pick_tile(N, tn), _pick_tile(K, tk)
    cost = pl.CostEstimate(
        flops=2 * M * N * K,
        transcendentals=(M * N) if activation == "gelu" else 0,
        bytes_accessed=(M * K + K * N + M * N) * x.dtype.itemsize)
    return pl.pallas_call(
        functools.partial(_dense_kernel, activation=activation),
        out_shape=jax.ShapeDtypeStruct((M, N), x.dtype),
        grid_spec=pltpu.PrefetchScalarGridSpec(
            num_scalar_prefetch=0,
            grid=(M // tm, N // tn, K // tk),
            in_specs=[
                pl.BlockSpec((tm, tk), lambda i, j, k: (i, k)),
                pl.BlockSpec((tk, tn), lambda i, j, k: (k, j)),
                pl.BlockSpec((1, tn), lambda i, j, k: (0, j)),
            ],
            out_specs=pl.BlockSpec((tm, tn), lambda i, j, k: (i, j)),
            scratch_shapes=[pltpu.VMEM((tm, tn), jnp.float32)]),
        compiler_params=pltpu.CompilerParams(
            dimension_semantics=("parallel", "parallel", "arbitrary"),
            vmem_limit_bytes=_VMEM_LIMIT),
        cost_estimate=cost,
    )(x, w, b.reshape(1, N))


def dense_residual_layernorm(x, w, b, residual, gamma, beta, *, tm=256, tk=512):
    M, K = x.shape
    H = w.shape[1]
    tm, tk = _pick_tile(M, tm), _pick_tile(K, tk)
    cost = pl.CostEstimate(
        flops=2 * M * H * K + 10 * M * H,
        transcendentals=0,
        bytes_accessed=(M * K + K * H + 2 * M * H) * x.dtype.itemsize)
    return pl.pallas_call(
        functools.partial(_dense_res_ln_kernel, eps=_LN_EPS),
        out_shape=jax.ShapeDtypeStruct((M, H), x.dtype),
        grid_spec=pltpu.PrefetchScalarGridSpec(
            num_scalar_prefetch=0,
            grid=(M // tm, K // tk),
            in_specs=[
                pl.BlockSpec((tm, tk), lambda i, k: (i, k)),   # x
                pl.BlockSpec((tk, H), lambda i, k: (k, 0)),    # w
                pl.BlockSpec((1, H), lambda i, k: (0, 0)),     # b
                pl.BlockSpec((tm, H), lambda i, k: (i, 0)),    # residual
                pl.BlockSpec((1, H), lambda i, k: (0, 0)),     # gamma
                pl.BlockSpec((1, H), lambda i, k: (0, 0)),     # beta
            ],
            out_specs=pl.BlockSpec((tm, H), lambda i, k: (i, 0)),
            scratch_shapes=[pltpu.VMEM((tm, H), jnp.float32)]),
        compiler_params=pltpu.CompilerParams(
            dimension_semantics=("parallel", "arbitrary"),
            vmem_limit_bytes=_VMEM_LIMIT),
        cost_estimate=cost,
    )(x, w, b.reshape(1, H), residual, gamma.reshape(1, H), beta.reshape(1, H))


def ffn_residual_layernorm(x, wi, bi, wo, bo, gamma, beta, *, tm=256, tki=512):
    M, H = x.shape
    I = wi.shape[1]
    tm, tki = _pick_tile(M, tm), _pick_tile(I, tki)
    cost = pl.CostEstimate(
        flops=4 * M * I * H + 10 * M * H,
        transcendentals=M * I,
        bytes_accessed=(2 * M * H + 2 * H * I) * x.dtype.itemsize)
    return pl.pallas_call(
        functools.partial(_ffn_kernel, eps=_LN_EPS),
        out_shape=jax.ShapeDtypeStruct((M, H), x.dtype),
        grid_spec=pltpu.PrefetchScalarGridSpec(
            num_scalar_prefetch=0,
            grid=(M // tm, I // tki),
            in_specs=[
                pl.BlockSpec((tm, H), lambda i, k: (i, 0)),    # x (also residual)
                pl.BlockSpec((H, tki), lambda i, k: (0, k)),   # wi
                pl.BlockSpec((1, tki), lambda i, k: (0, k)),   # bi
                pl.BlockSpec((tki, H), lambda i, k: (k, 0)),   # wo
                pl.BlockSpec((1, H), lambda i, k: (0, 0)),     # bo
                pl.BlockSpec((1, H), lambda i, k: (0, 0)),     # gamma
                pl.BlockSpec((1, H), lambda i, k: (0, 0)),     # beta
            ],
            out_specs=pl.BlockSpec((tm, H), lambda i, k: (i, 0)),
            scratch_shapes=[pltpu.VMEM((tm, H), jnp.float32)]),
        compiler_params=pltpu.CompilerParams(
            dimension_semantics=("parallel", "arbitrary"),
            vmem_limit_bytes=_VMEM_LIMIT),
        cost_estimate=cost,
    )(x, wi, bi.reshape(1, I), wo, bo.reshape(1, H),
      gamma.reshape(1, H), beta.reshape(1, H))


def mha_attention(qkv, add_mask, num_heads):
    # TODO(synk): for long sequences (S >~ 1k), switch to a flash-style K-tiled
    # online-softmax kernel; full S x S scores are fine at BERT's S <= 512.
    B, S, threeH = qkv.shape
    H = threeH // 3
    dH = H // num_heads
    scale = 1.0 / math.sqrt(dH)
    cost = pl.CostEstimate(
        flops=4 * B * num_heads * S * S * dH,
        transcendentals=B * num_heads * S * S,
        bytes_accessed=(B * S * threeH + B * S * H) * qkv.dtype.itemsize)
    return pl.pallas_call(
        functools.partial(_attn_kernel, num_heads=num_heads,
                          head_dim=dH, scale=scale),
        out_shape=jax.ShapeDtypeStruct((B, S, H), qkv.dtype),
        grid_spec=pltpu.PrefetchScalarGridSpec(
            num_scalar_prefetch=0,
            grid=(B,),
            in_specs=[
                pl.BlockSpec((1, S, threeH), lambda b: (b, 0, 0)),
                pl.BlockSpec((1, 1, S), lambda b: (b, 0, 0)),
            ],
            out_specs=pl.BlockSpec((1, S, H), lambda b: (b, 0, 0))),
        compiler_params=pltpu.CompilerParams(
            dimension_semantics=("parallel",),
            vmem_limit_bytes=_VMEM_LIMIT),
        cost_estimate=cost,
    )(qkv, add_mask)


def layernorm(x, gamma, beta, out_dtype, *, tm=256):
    M, H = x.shape
    tm = _pick_tile(M, tm)
    return pl.pallas_call(
        functools.partial(_ln_kernel, eps=_LN_EPS),
        out_shape=jax.ShapeDtypeStruct((M, H), out_dtype),
        grid_spec=pltpu.PrefetchScalarGridSpec(
            num_scalar_prefetch=0,
            grid=(M // tm,),
            in_specs=[
                pl.BlockSpec((tm, H), lambda i: (i, 0)),
                pl.BlockSpec((1, H), lambda i: (0, 0)),
                pl.BlockSpec((1, H), lambda i: (0, 0)),
            ],
            out_specs=pl.BlockSpec((tm, H), lambda i: (i, 0))),
        compiler_params=pltpu.CompilerParams(
            dimension_semantics=("parallel",),
            vmem_limit_bytes=_VMEM_LIMIT),
    )(x, gamma.reshape(1, H), beta.reshape(1, H))


# ----------------------------------------------------------------------------
# Parameter init (deterministic, synthetic "BERT" config; weights in bf16)
# ----------------------------------------------------------------------------

def init_params(key, *, vocab, max_pos, hidden, num_heads, num_layers, intermediate):
    def nrm(k, shape, dtype=jnp.float32):
        return (0.02 * jax.random.normal(k, shape, dtype=jnp.float32)).astype(dtype)

    keys = jax.random.split(key, 3 + num_layers)
    params = {
        "word_emb": nrm(keys[0], (vocab, hidden)),
        "pos_emb": nrm(keys[1], (max_pos, hidden)),
        "type_emb": nrm(keys[2], (2, hidden)),
        "emb_ln_g": jnp.ones((hidden,), jnp.float32),
        "emb_ln_b": jnp.zeros((hidden,), jnp.float32),
        "num_heads": num_heads,
        "layers": [],
    }
    for li in range(num_layers):
        lk = jax.random.split(keys[3 + li], 6)
        wq = nrm(lk[0], (hidden, hidden), jnp.bfloat16)
        wk = nrm(lk[1], (hidden, hidden), jnp.bfloat16)
        wv = nrm(lk[2], (hidden, hidden), jnp.bfloat16)
        params["layers"].append({
            "w_qkv": jnp.concatenate([wq, wk, wv], axis=1),   # fused [H, 3H]
            "b_qkv": jnp.zeros((3 * hidden,), jnp.float32),
            "wo": nrm(lk[3], (hidden, hidden), jnp.bfloat16),
            "bo": jnp.zeros((hidden,), jnp.float32),
            "ln1_g": jnp.ones((hidden,), jnp.float32),
            "ln1_b": jnp.zeros((hidden,), jnp.float32),
            "wi": nrm(lk[4], (hidden, intermediate), jnp.bfloat16),
            "bi": jnp.zeros((intermediate,), jnp.float32),
            "wo2": nrm(lk[5], (intermediate, hidden), jnp.bfloat16),
            "bo2": jnp.zeros((hidden,), jnp.float32),
            "ln2_g": jnp.ones((hidden,), jnp.float32),
            "ln2_b": jnp.zeros((hidden,), jnp.float32),
        })
    return params


# ----------------------------------------------------------------------------
# Forward pass (BertModel last_hidden_state[:, 0])
# ----------------------------------------------------------------------------

def encoder_forward(params, input_ids, attention_mask):
    B, S = input_ids.shape
    H = params["word_emb"].shape[1]
    nH = params["num_heads"]

    # Embeddings (gather/adds are glue; LayerNorm is a Pallas kernel, no fake residual).
    word = jnp.take(params["word_emb"], input_ids, axis=0)          # [B,S,H] f32
    pos = params["pos_emb"][:S][None, :, :]
    typ = params["type_emb"][0][None, None, :]                      # token_type_ids = 0
    emb = (word + pos + typ).reshape(B * S, H)
    hidden = layernorm(emb, params["emb_ln_g"], params["emb_ln_b"],
                       out_dtype=jnp.bfloat16)                      # bf16 activations

    # Additive attention mask, [B,1,S] (like HF's extended_attention_mask).
    add_mask = ((1.0 - attention_mask.astype(jnp.float32)) * -10000.0).reshape(B, 1, S)

    for layer in params["layers"]:
        # --- self attention (fused QKV, heads on lane axis, no transposes) ---
        qkv = dense(hidden, layer["w_qkv"], layer["b_qkv"])              # [B*S, 3H]
        ctx = mha_attention(qkv.reshape(B, S, 3 * H), add_mask, nH)      # [B, S, H]
        # output projection + residual + LayerNorm fused in one kernel
        hidden = dense_residual_layernorm(
            ctx.reshape(B * S, H), layer["wo"], layer["bo"],
            hidden, layer["ln1_g"], layer["ln1_b"])
        # --- feed-forward: fully fused (intermediate stays in VMEM) ---
        hidden = ffn_residual_layernorm(
            hidden, layer["wi"], layer["bi"], layer["wo2"], layer["bo2"],
            layer["ln2_g"], layer["ln2_b"])

    last_hidden_state = hidden.reshape(B, S, H)
    return last_hidden_state[:, 0].astype(jnp.float32)                  # CLS, [B, H]


# ----------------------------------------------------------------------------
# Driver
# ----------------------------------------------------------------------------

if __name__ == "__main__":
    # Small synthetic BERT config.
    VOCAB, MAX_POS = 100, 16
    HIDDEN, HEADS, LAYERS, INTER = 32, 2, 2, 64
    BATCH, SEQ = 2, 8

    key = jax.random.PRNGKey(0)
    k_params, k_ids = jax.random.split(key)
    params = init_params(k_params, vocab=VOCAB, max_pos=MAX_POS, hidden=HIDDEN,
                         num_heads=HEADS, num_layers=LAYERS, intermediate=INTER)

    # TODO(synk): BertTokenizer (string -> token ids) has no Pallas equivalent;
    # deterministic token ids + padding mask are synthesized here instead.
    input_ids = jax.random.randint(k_ids, (BATCH, SEQ), 1, VOCAB, dtype=jnp.int32)
    attention_mask = jnp.ones((BATCH, SEQ), dtype=jnp.int32)
    # pad the tail of the second "request" to exercise the mask path
    attention_mask = attention_mask.at[1, SEQ - 2:].set(0)
    input_ids = input_ids.at[1, SEQ - 2:].set(0)

    encoded = encoder_forward(params, input_ids, attention_mask)
    jax.block_until_ready(encoded)
    assert encoded.shape == (BATCH, HIDDEN) and encoded.dtype == jnp.float32
    print("KERNEL_OK")
</pallas_src>

<mosaic_0001>
module attributes {stable_mosaic.version = 11 : i64} {
  func.func @_ln_kernel(%arg0: i32, %arg1: memref<16x32xf32, #tpu.memory_space<vmem>>, %arg2: memref<1x32xf32, #tpu.memory_space<vmem>>, %arg3: memref<1x32xf32, #tpu.memory_space<vmem>>, %arg4: memref<16x32xbf16, #tpu.memory_space<vmem>>) attributes {dimension_semantics = [#tpu.dimension_semantics<parallel>], iteration_bounds = array<i64: 1>, scalar_prefetch = 0 : i64, scratch_operands = 0 : i64, tpu.core_type = #tpu.core_type<tc>, window_params = [{transform_indices = @transform_0, window_bounds = array<i64: 16, 32>}, {pipeline_mode = #tpu.pipeline_mode<synchronous>, transform_indices = @transform_1, window_bounds = array<i64: 1, 32>}, {pipeline_mode = #tpu.pipeline_mode<synchronous>, transform_indices = @transform_2, window_bounds = array<i64: 1, 32>}, {transform_indices = @transform_3, window_bounds = array<i64: 16, 32>}]} {
    %c0 = arith.constant 0 : index
    %c0_0 = arith.constant 0 : index
    %0 = vector.load %arg1[%c0, %c0_0] : memref<16x32xf32, #tpu.memory_space<vmem>>, vector<16x32xf32>
    %cst = arith.constant dense<0.000000e+00> : vector<16xf32>
    %1 = vector.multi_reduction <add>, %0, %cst [1] : vector<16x32xf32> to vector<16xf32>
    %2 = vector.shape_cast %1 : vector<16xf32> to vector<16x1xf32>
    %cst_1 = arith.constant 3.200000e+01 : f32
    %3 = vector.broadcast %cst_1 : f32 to vector<16x1xf32>
    %4 = arith.divf %2, %3 : vector<16x1xf32>
    %5 = vector.broadcast %4 : vector<16x1xf32> to vector<16x32xf32>
    %6 = arith.subf %0, %5 : vector<16x32xf32>
    %7 = vector.broadcast %4 : vector<16x1xf32> to vector<16x32xf32>
    %8 = arith.subf %0, %7 : vector<16x32xf32>
    %9 = arith.mulf %6, %8 : vector<16x32xf32>
    %cst_2 = arith.constant dense<0.000000e+00> : vector<16xf32>
    %10 = vector.multi_reduction <add>, %9, %cst_2 [1] : vector<16x32xf32> to vector<16xf32>
    %11 = vector.shape_cast %10 : vector<16xf32> to vector<16x1xf32>
    %cst_3 = arith.constant 3.200000e+01 : f32
    %12 = vector.broadcast %cst_3 : f32 to vector<16x1xf32>
    %13 = arith.divf %11, %12 : vector<16x1xf32>
    %14 = vector.broadcast %4 : vector<16x1xf32> to vector<16x32xf32>
    %15 = arith.subf %0, %14 : vector<16x32xf32>
    %cst_4 = arith.constant 9.99999996E-13 : f32
    %16 = vector.broadcast %cst_4 : f32 to vector<16x1xf32>
    %17 = arith.addf %13, %16 : vector<16x1xf32>
    %18 = math.rsqrt %17 : vector<16x1xf32>
    %19 = vector.broadcast %18 : vector<16x1xf32> to vector<16x32xf32>
    %20 = arith.mulf %15, %19 : vector<16x32xf32>
    %c0_5 = arith.constant 0 : index
    %c0_6 = arith.constant 0 : index
    %21 = vector.load %arg2[%c0_5, %c0_6] : memref<1x32xf32, #tpu.memory_space<vmem>>, vector<1x32xf32>
    %22 = vector.broadcast %21 : vector<1x32xf32> to vector<16x32xf32>
    %23 = arith.mulf %20, %22 : vector<16x32xf32>
    %c0_7 = arith.constant 0 : index
    %c0_8 = arith.constant 0 : index
    %24 = vector.load %arg3[%c0_7, %c0_8] : memref<1x32xf32, #tpu.memory_space<vmem>>, vector<1x32xf32>
    %25 = vector.broadcast %24 : vector<1x32xf32> to vector<16x32xf32>
    %26 = arith.addf %23, %25 : vector<16x32xf32>
    %27 = arith.truncf %26 : vector<16x32xf32> to vector<16x32xbf16>
    %c0_9 = arith.constant 0 : index
    %c0_10 = arith.constant 0 : index
    %28 = vector.load %arg4[%c0_9, %c0_10] : memref<16x32xbf16, #tpu.memory_space<vmem>>, vector<16x32xbf16>
    tpu.vector_store %arg4[%c0_9, %c0_10], %27 {strides = array<i32>} : memref<16x32xbf16, #tpu.memory_space<vmem>>, vector<16x32xbf16>,
    return
  }
  func.func @transform_0(%arg0: i32) -> (i32, i32) {
    %c0_i32 = arith.constant 0 : i32
    %c0_i32_0 = arith.constant 0 : i32
    return %arg0, %c0_i32 : i32, i32
  }
  func.func @transform_1(%arg0: i32) -> (i32, i32) {
    %c0_i32 = arith.constant 0 : i32
    %c0_i32_0 = arith.constant 0 : i32
    %c0_i32_1 = arith.constant 0 : i32
    return %c0_i32, %c0_i32_0 : i32, i32
  }
  func.func @transform_2(%arg0: i32) -> (i32, i32) {
    %c0_i32 = arith.constant 0 : i32
    %c0_i32_0 = arith.constant 0 : i32
    %c0_i32_1 = arith.constant 0 : i32
    return %c0_i32, %c0_i32_0 : i32, i32
  }
  func.func @transform_3(%arg0: i32) -> (i32, i32) {
    %c0_i32 = arith.constant 0 : i32
    %c0_i32_0 = arith.constant 0 : i32
    return %arg0, %c0_i32 : i32, i32
  }
}

</mosaic_0001>

<llo_original>
// kernel: tpu_custom_call.1
$region0: #{tpu_custom_call.1}
  #allocation0 [shape = 'u32[]', space=smem, size = 0x4, offset = 0x4, fixed_abs, tag = 'smem constant byte address 0x4 - core index']
  #allocation1 [shape = 'u32[144,128]{1,0:T(1,128)}', space=vmem, size = 0x12000, scoped, tag = 'internal scratch']
  %s0 = inlined_call_operand.hbm [shape: f32[16,32], index: 0, kind: input, shape index: {}]
  %s1 = inlined_call_operand.hbm [shape: f32[1,32], index: 1, kind: input, shape index: {}]
  %s2 = inlined_call_operand.hbm [shape: f32[1,32], index: 2, kind: input, shape index: {}]
  %s3 = inlined_call_operand.hbm [shape: bf16[16,32], index: 3, kind: output, shape index: {}]
  %s4 = sld [smem:[#allocation0]]
  $region34: #{tpu_custom_call.1} parent=0
    _
  %s6 = ssub.s32 1, %s4
  %s7 = scalar_select 0, %s6, %s4
  $region1: #{tpu_custom_call.1} parent=0
    #allocation2 [shape = 'u8[8192]{0}', space=vmem, size = 0x2000, scoped, tag = 'input window, operand 0, single buffered']
    #allocation3 [shape = 's32[1]{0}', space=sflag, size = 0x4, scoped, tag = 'scoped memory for tpu_custom_call.1']
    #allocation4 [shape = 's32[1]{0}', space=sflag, size = 0x4, scoped, tag = 'scoped memory for tpu_custom_call.1']
    #allocation5 [shape = 'u8[512]{0}', space=vmem, size = 0x400, scoped, tag = 'input window, operand 1, single buffered']
    #allocation6 [shape = 's32[1]{0}', space=sflag, size = 0x4, scoped, tag = 'scoped memory for tpu_custom_call.1']
    #allocation7 [shape = 'u8[512]{0}', space=vmem, size = 0x400, scoped, tag = 'input window, operand 2, single buffered']
    #allocation8 [shape = 'u8[4096]{0}', space=vmem, size = 0x1000, scoped, tag = 'output window, operand 0, single buffered']
    %8 = vsyncpa [#allocation3], 0
    %9 = vsyncpa [#allocation6], 0
    %10 = vsyncpa [#allocation4], 0
    // Predicated region
    $region2: #{tpu_custom_call.1} parent=1 // pred_check
      _
    $region3: #{tpu_custom_call.1} parent=1 // pred_check_branch
      %12 = sbr.rel (0) target = $region5
    $region4: #{tpu_custom_call.1} parent=1 // pred_region
      %s14 = ssub.s32 256, 256
      %15 = vsyncadd [#allocation3], %s14
      %s16 = sshll.u32 [#allocation2], 4
      %s17 = int_to_ptr.vmem [resolvable:$true] %s16
      %22 = dma.hbm_to_vmem [thread:$0]  %s0, 256, %s17, [#allocation3], 128, 128, 8
    $region5: #{tpu_custom_call.1} parent=1 // pred_fallthru
      _
    // Predicated region
    $region6: #{tpu_custom_call.1} parent=1 // pred_check
      _
    $region7: #{tpu_custom_call.1} parent=1 // pred_check_branch
      %24 = sbr.rel (0) target = $region9
    $region8: #{tpu_custom_call.1} parent=1 // pred_region
      %s26 = ssub.s32 16, 16
      %27 = vsyncadd [#allocation6], %s26
      %s29 = sshll.u32 [#allocation5], 4
      %s30 = int_to_ptr.vmem [resolvable:$true] %s29
      %32 = dma.hbm_to_vmem [thread:$0]  %s1, 16, %s30, [#allocation6]
    $region9: #{tpu_custom_call.1} parent=1 // pred_fallthru
      _
    // Predicated region
    $region10: #{tpu_custom_call.1} parent=1 // pred_check
      _
    $region11: #{tpu_custom_call.1} parent=1 // pred_check_branch
      %34 = sbr.rel (0) target = $region13
    $region12: #{tpu_custom_call.1} parent=1 // pred_region
      %s36 = ssub.s32 16, 16
      %37 = vsyncadd [#allocation6], %s36
      %s39 = sshll.u32 [#allocation7], 4
      %s40 = int_to_ptr.vmem [resolvable:$true] %s39
      %42 = dma.hbm_to_vmem [thread:$0]  %s2, 16, %s40, [#allocation6]
    $region13: #{tpu_custom_call.1} parent=1 // pred_fallthru
      _
    // Predicated region
    $region14: #{tpu_custom_call.1} parent=1 // pred_check
      _
    $region15: #{tpu_custom_call.1} parent=1 // pred_check_branch
      %44 = sbr.rel (0) target = $region17
    $region16: #{tpu_custom_call.1} parent=1 // pred_region
      %45 = dma.done [#allocation3], 256
    $region17: #{tpu_custom_call.1} parent=1 // pred_fallthru
      _
    // Predicated region
    $region18: #{tpu_custom_call.1} parent=1 // pred_check
      _
    $region19: #{tpu_custom_call.1} parent=1 // pred_check_branch
      %47 = sbr.rel (0) target = $region21
    $region20: #{tpu_custom_call.1} parent=1 // pred_region
      %48 = dma.done [#allocation6], 16
    $region21: #{tpu_custom_call.1} parent=1 // pred_fallthru
      _
    // Predicated region
    $region22: #{tpu_custom_call.1} parent=1 // pred_check
      _
    $region23: #{tpu_custom_call.1} parent=1 // pred_check_branch
      %50 = sbr.rel (0) target = $region25
    $region24: #{tpu_custom_call.1} parent=1 // pred_region
      %51 = dma.done [#allocation6], 16
    $region25: #{tpu_custom_call.1} parent=1 // pred_fallthru
      _
    %v52 = vld [vmem:[#allocation2] sm:$0xff]
    %v53 = vld [vmem:[#allocation2 + $0x8] sm:$0xff]
    %vm54 = vcmask 261120
    %v55 = vsel %vm54, %v52, 0.0
    %56 = vadd.xlane.f32.xlu0 %v55
    %v57 = vpop.xlane.xlu0 %56
    %v58 = vsel %vm54, %v53, 0.0
    %59 = vadd.xlane.f32.xlu0 %v58
    %v60 = vpop.xlane.xlu0 %59
    %v61 = vrcp.pop 32.0
    %v62 = vmul.f32 %v57, %v61
    %v63 = vmul.f32 %v60, %v61
    %v64 = vsub.f32 %v52, %v62
    %v65 = vsub.f32 %v53, %v63
    %v66 = vmul.f32 %v64, %v64
    %v67 = vmul.f32 %v65, %v65
    %v68 = vsel %vm54, %v66, 0.0
    %69 = vadd.xlane.f32.xlu0 %v68
    %v70 = vpop.xlane.xlu0 %69
    %v71 = vsel %vm54, %v67, 0.0
    %72 = vadd.xlane.f32.xlu0 %v71
    %v73 = vpop.xlane.xlu0 %72
    %v74 = vmul.f32 %v70, %v61
    %v75 = vmul.f32 %v73, %v61
    %v76 = vadd.f32 %v74, 1e-12
    %v77 = vadd.f32 %v75, 1e-12
    %v78 = vrsqrt.pop %v76
    %v79 = vrsqrt.pop %v77
    %v80 = vmul.f32 %v64, %v78
    %v81 = vmul.f32 %v65, %v79
    %v82 = vld [vmem:[#allocation5] sm:$0x1]
    %v84 = vlaneseq
    %v85 = vshrl.u32 %v84, 7
    %v86 = vsub.s32 0, %v85
    %v87 = vrot.slane %v82, %v86
    %v89 = vmul.f32 %v80, %v87
    %v90 = vmul.f32 %v81, %v87
    %v91 = vld [vmem:[#allocation7] sm:$0x1]
    %v93 = vlaneseq
    %v94 = vshrl.u32 %v93, 7
    %v95 = vsub.s32 0, %v94
    %v96 = vrot.slane %v91, %v95
    %v98 = vadd.f32 %v89, %v96
    %v99 = vadd.f32 %v90, %v96
    %v100 = vpack.c.bf16 %v99, %v98
    %v102 = vunpack.c.l.b16 %v100
    %v103 = vunpack.c.h.b16 %v100
    %v104 = vpack.c.b16 %v102, %v102
    %v105 = vpack.c.b16 %v103, %v103
    %vm108 = vcmask 257024
    %109 = vst.msk [vmem:[#allocation8] sm:$0xf] %vm108, %v104
    %110 = vst.msk [vmem:[#allocation8 + $0x4] sm:$0xf] %vm108, %v105
    // Predicated region
    $region26: #{tpu_custom_call.1} parent=1 // pred_check
      _
    $region27: #{tpu_custom_call.1} parent=1 // pred_check_branch
      %112 = sbr.rel (0) target = $region29
    $region28: #{tpu_custom_call.1} parent=1 // pred_region
      %s114 = ssub.s32 128, 128
      %115 = vsyncadd [#allocation4], %s114
      %s116 = sshll.u32 [#allocation8], 4
      %s117 = int_to_ptr.vmem [resolvable:$true] %s116
      %122 = dma.vmem_to_hbm [thread:$0]  %s117, 128, %s3, [#allocation4], 64, 64, 4
    $region29: #{tpu_custom_call.1} parent=1 // pred_fallthru
      _
    // Predicated region
    $region30: #{tpu_custom_call.1} parent=1 // pred_check
      _
    $region31: #{tpu_custom_call.1} parent=1 // pred_check_branch
      %124 = sbr.rel (0) target = $region33
    $region32: #{tpu_custom_call.1} parent=1 // pred_region
      %125 = dma.done [#allocation4], 128
    $region33: #{tpu_custom_call.1} parent=1 // pred_fallthru
      _
    %126 = vsyncpa [#allocation3], 1
    %127 = vsyncpa [#allocation6], 1
    %128 = vsyncpa [#allocation4], 1

</llo_original>
